<compile_context>
chip_gen: v7x
topology: tpu7x:2x2x1
jax: 0.10.0
libtpu: 0.0.40
codegen_flags: <defaults>
</compile_context>

<pallas_src>
import jax
import jax.numpy as jnp
from jax.experimental import pallas as pl
from jax.experimental.pallas import tpu as pltpu


def _round_up(x: int, m: int) -> int:
    return (x + m - 1) // m * m


def _cdiv(a: int, b: int) -> int:
    return -(-a // b)


# --------------------------------------------------------------------------- #
# Kernel
# --------------------------------------------------------------------------- #
def _mlp_kernel(x_ref, w1_ref, b1_ref, w2_ref, b2_ref, o_ref):
    # Cast activations to bf16 in-kernel (VPU work hidden under DMA / MXU).
    x = x_ref[...].astype(jnp.bfloat16)
    # First linear: bf16 MXU, f32 accumulate; bias + ReLU in f32 on the VPU.
    h = jnp.dot(x, w1_ref[...], preferred_element_type=jnp.float32)
    h = jnp.maximum(h + b1_ref[...], 0.0)            # broadcast [1, Hp]
    # Second linear: downcast hidden to bf16 for the MXU, accumulate f32.
    y = jnp.dot(h.astype(jnp.bfloat16), w2_ref[...],
                preferred_element_type=jnp.float32)
    # Lane-dense (128-wide) bf16 store.
    o_ref[...] = (y + b2_ref[...]).astype(o_ref.dtype)


# --------------------------------------------------------------------------- #
# One-time parameter preparation (hoisted out of the forward pass)
# --------------------------------------------------------------------------- #
def prepare_params(w1, b1, w2, b2):
    """Pad to lane-dense shapes and cast weights to bf16, once.

    Torch layout is transposed here: w1 [in, hidden], w2 [hidden, out],
    biases [1, hidden] / [1, out].
    """
    in_f, hidden = w1.shape
    out_f = w2.shape[1]
    hidden_p = _round_up(hidden, 128)          # 500 -> 512
    out_p = _round_up(out_f, 128)              # 16  -> 128

    w1p = jnp.pad(w1, ((0, 0), (0, hidden_p - hidden))).astype(jnp.bfloat16)
    b1p = jnp.pad(b1, ((0, 0), (0, hidden_p - hidden)))                  # f32
    w2p = jnp.pad(w2, ((0, hidden_p - hidden), (0, out_p - out_f))).astype(
        jnp.bfloat16)
    b2p = jnp.pad(b2, ((0, 0), (0, out_p - out_f)))                      # f32

    return {
        "w1p": w1p, "b1p": b1p, "w2p": w2p, "b2p": b2p,
        "in_f": in_f, "hidden_p": hidden_p, "out_f": out_f, "out_p": out_p,
    }


# --------------------------------------------------------------------------- #
# Forward pass
# --------------------------------------------------------------------------- #
def my_neural_net_forward(x, params, *, block_m: int = 2048):
    """x: [N, in_features] f32 -> [N, out_features] f32."""
    n, in_f = x.shape
    assert in_f == params["in_f"]
    hidden_p = params["hidden_p"]
    out_f = params["out_f"]
    out_p = params["out_p"]

    # ---- adaptive row tiling -------------------------------------------- #
    n8 = _round_up(n, 8)
    steps = _cdiv(n8, block_m)
    if n8 >= 16:
        steps = max(steps, 2)          # v7x: >=2 grid steps so both TCs work
    tm = _round_up(_cdiv(n8, steps), 8)
    steps = _cdiv(n8, tm)
    n_p = steps * tm                   # pad waste bounded by < tm (not ~n)

    xp = x if n_p == n else jnp.pad(x, ((0, n_p - n), (0, 0)))   # stays f32

    # ---- VMEM budget (explicit, v7x-safe) -------------------------------- #
    vmem_bytes = (
        2 * tm * in_f * 4                         # x tile, double-buffered f32
        + 2 * tm * out_p * 2                      # out tile, double-buffered bf16
        + 2 * (in_f * hidden_p * 2 + hidden_p * out_p * 2
               + hidden_p * 4 + out_p * 4)        # resident weights / biases
        + tm * hidden_p * (4 + 2)                 # h (f32) + bf16 copy
    )
    vmem_limit = min(48 * 1024 * 1024, max(16 * 1024 * 1024, 2 * vmem_bytes))

    # ---- cost estimate ---------------------------------------------------- #
    bytes_accessed = (
        n_p * in_f * 4                                   # x (f32, read once)
        + in_f * hidden_p * 2 + hidden_p * out_p * 2     # bf16 weights
        + hidden_p * 4 + out_p * 4                       # f32 biases
        + n_p * out_p * 2                                # bf16 output
    )
    flops = 2 * n_p * (in_f * hidden_p + hidden_p * out_p)

    y = pl.pallas_call(
        _mlp_kernel,
        out_shape=jax.ShapeDtypeStruct((n_p, out_p), jnp.bfloat16),
        grid_spec=pltpu.PrefetchScalarGridSpec(
            num_scalar_prefetch=0,
            grid=(steps,),
            in_specs=[
                pl.BlockSpec((tm, in_f), lambda i: (i, 0)),         # x rows
                pl.BlockSpec((in_f, hidden_p), lambda i: (0, 0)),   # w1 resident
                pl.BlockSpec((1, hidden_p), lambda i: (0, 0)),      # b1 resident
                pl.BlockSpec((hidden_p, out_p), lambda i: (0, 0)),  # w2 resident
                pl.BlockSpec((1, out_p), lambda i: (0, 0)),         # b2 resident
            ],
            out_specs=pl.BlockSpec((tm, out_p), lambda i: (i, 0)),
        ),
        compiler_params=pltpu.CompilerParams(
            dimension_semantics=("parallel",),
            vmem_limit_bytes=int(vmem_limit),
        ),
        cost_estimate=pl.CostEstimate(
            flops=flops, transcendentals=0, bytes_accessed=bytes_accessed),
    )(xp, params["w1p"], params["b1p"], params["w2p"], params["b2p"])

    # Tiny slice; cast the useful columns back to f32 to match module dtype.
    return y[:n, :out_f].astype(jnp.float32)


# --------------------------------------------------------------------------- #
# Deterministic init mimicking torch.nn.Linear's U(-1/sqrt(fan_in), +...)
# --------------------------------------------------------------------------- #
def init_params(key, in_features, out_features, hidden=500):
    k1, k2, k3, k4 = jax.random.split(key, 4)
    bound1 = 1.0 / jnp.sqrt(in_features)
    bound2 = 1.0 / jnp.sqrt(hidden)
    w1 = jax.random.uniform(k1, (in_features, hidden), jnp.float32, -bound1, bound1)
    b1 = jax.random.uniform(k2, (1, hidden), jnp.float32, -bound1, bound1)
    w2 = jax.random.uniform(k3, (hidden, out_features), jnp.float32, -bound2, bound2)
    b2 = jax.random.uniform(k4, (1, out_features), jnp.float32, -bound2, bound2)
    return w1, b1, w2, b2


if __name__ == "__main__":
    in_features = 32
    out_features = 16
    batch = 8

    key = jax.random.PRNGKey(0)
    kx, kp = jax.random.split(key)
    x = jax.random.normal(kx, (batch, in_features), jnp.float32)
    w1, b1, w2, b2 = init_params(kp, in_features, out_features)

    # One-time parameter preparation (padding + bf16 cast happen only here).
    params = jax.tree_util.tree_map(jax.block_until_ready,
                                    prepare_params(w1, b1, w2, b2))

    fwd = jax.jit(lambda xx: my_neural_net_forward(xx, params))
    y = fwd(x)
    jax.block_until_ready(y)
    assert y.shape == (batch, out_features)
    assert y.dtype == jnp.float32

    # Reference 1: same bf16-operand / f32-accumulate math as the kernel
    # (with the bf16 output round-trip).
    xb = x.astype(jnp.bfloat16)
    w1b = w1.astype(jnp.bfloat16)
    w2b = w2.astype(jnp.bfloat16)
    h_ref = jnp.maximum(
        jnp.dot(xb, w1b, preferred_element_type=jnp.float32) + b1, 0.0)
    ref_bf16 = (jnp.dot(h_ref.astype(jnp.bfloat16), w2b,
                        preferred_element_type=jnp.float32) + b2)
    ref_bf16 = ref_bf16.astype(jnp.bfloat16).astype(jnp.float32)
    assert jnp.allclose(y, ref_bf16, atol=1e-2, rtol=1e-2)

    # Reference 2: full-precision f32 module semantics (loose tol for bf16 path).
    ref_f32 = jnp.maximum(x @ w1 + b1, 0.0) @ w2 + b2
    assert jnp.allclose(y, ref_f32, atol=5e-2, rtol=5e-2)

    print("KERNEL_OK")
</pallas_src>

<mosaic_0001>
module attributes {stable_mosaic.version = 11 : i64} {
  func.func @_mlp_kernel(%arg0: i32, %arg1: memref<8x32xf32, #tpu.memory_space<vmem>>, %arg2: memref<32x512xbf16, #tpu.memory_space<vmem>>, %arg3: memref<1x512xf32, #tpu.memory_space<vmem>>, %arg4: memref<512x128xbf16, #tpu.memory_space<vmem>>, %arg5: memref<1x128xf32, #tpu.memory_space<vmem>>, %arg6: memref<8x128xbf16, #tpu.memory_space<vmem>>) attributes {dimension_semantics = [#tpu.dimension_semantics<parallel>], iteration_bounds = array<i64: 1>, scalar_prefetch = 0 : i64, scratch_operands = 0 : i64, tpu.core_type = #tpu.core_type<tc>, window_params = [{transform_indices = @transform_0, window_bounds = array<i64: 8, 32>}, {pipeline_mode = #tpu.pipeline_mode<synchronous>, transform_indices = @transform_1, window_bounds = array<i64: 32, 512>}, {pipeline_mode = #tpu.pipeline_mode<synchronous>, transform_indices = @transform_2, window_bounds = array<i64: 1, 512>}, {pipeline_mode = #tpu.pipeline_mode<synchronous>, transform_indices = @transform_3, window_bounds = array<i64: 512, 128>}, {pipeline_mode = #tpu.pipeline_mode<synchronous>, transform_indices = @transform_4, window_bounds = array<i64: 1, 128>}, {transform_indices = @transform_5, window_bounds = array<i64: 8, 128>}]} {
    %c0 = arith.constant 0 : index
    %c0_0 = arith.constant 0 : index
    %0 = vector.load %arg1[%c0, %c0_0] : memref<8x32xf32, #tpu.memory_space<vmem>>, vector<8x32xf32>
    %1 = arith.truncf %0 : vector<8x32xf32> to vector<8x32xbf16>
    %c0_1 = arith.constant 0 : index
    %c0_2 = arith.constant 0 : index
    %2 = vector.load %arg2[%c0_1, %c0_2] : memref<32x512xbf16, #tpu.memory_space<vmem>>, vector<32x512xbf16>
    %cst = arith.constant dense<0.000000e+00> : vector<8x512xf32>
    %3 = tpu.matmul %1, %2, %cst {dimension_numbers = #tpu.dot_dimension_numbers<[1], [0], [0], [1], [0, 0, 1, 1], [], []>} : vector<8x32xbf16>, vector<32x512xbf16>, vector<8x512xf32> -> vector<8x512xf32>
    %c0_3 = arith.constant 0 : index
    %c0_4 = arith.constant 0 : index
    %4 = vector.load %arg3[%c0_3, %c0_4] : memref<1x512xf32, #tpu.memory_space<vmem>>, vector<1x512xf32>
    %5 = vector.broadcast %4 : vector<1x512xf32> to vector<8x512xf32>
    %6 = arith.addf %3, %5 : vector<8x512xf32>
    %cst_5 = arith.constant 0.000000e+00 : f32
    %7 = vector.broadcast %cst_5 : f32 to vector<8x512xf32>
    %8 = arith.maximumf %6, %7 : vector<8x512xf32>
    %9 = arith.truncf %8 : vector<8x512xf32> to vector<8x512xbf16>
    %c0_6 = arith.constant 0 : index
    %c0_7 = arith.constant 0 : index
    %10 = vector.load %arg4[%c0_6, %c0_7] : memref<512x128xbf16, #tpu.memory_space<vmem>>, vector<512x128xbf16>
    %cst_8 = arith.constant dense<0.000000e+00> : vector<8x128xf32>
    %11 = tpu.matmul %9, %10, %cst_8 {dimension_numbers = #tpu.dot_dimension_numbers<[1], [0], [0], [1], [0, 0, 1, 1], [], []>} : vector<8x512xbf16>, vector<512x128xbf16>, vector<8x128xf32> -> vector<8x128xf32>
    %c0_9 = arith.constant 0 : index
    %c0_10 = arith.constant 0 : index
    %12 = vector.load %arg5[%c0_9, %c0_10] : memref<1x128xf32, #tpu.memory_space<vmem>>, vector<1x128xf32>
    %13 = vector.broadcast %12 : vector<1x128xf32> to vector<8x128xf32>
    %14 = arith.addf %11, %13 : vector<8x128xf32>
    %15 = arith.truncf %14 : vector<8x128xf32> to vector<8x128xbf16>
    %c0_11 = arith.constant 0 : index
    %c0_12 = arith.constant 0 : index
    %16 = vector.load %arg6[%c0_11, %c0_12] : memref<8x128xbf16, #tpu.memory_space<vmem>>, vector<8x128xbf16>
    tpu.vector_store %arg6[%c0_11, %c0_12], %15 {strides = array<i32>} : memref<8x128xbf16, #tpu.memory_space<vmem>>, vector<8x128xbf16>,
    return
  }
  func.func @transform_0(%arg0: i32) -> (i32, i32) {
    %c0_i32 = arith.constant 0 : i32
    %c0_i32_0 = arith.constant 0 : i32
    return %arg0, %c0_i32 : i32, i32
  }
  func.func @transform_1(%arg0: i32) -> (i32, i32) {
    %c0_i32 = arith.constant 0 : i32
    %c0_i32_0 = arith.constant 0 : i32
    %c0_i32_1 = arith.constant 0 : i32
    return %c0_i32, %c0_i32_0 : i32, i32
  }
  func.func @transform_2(%arg0: i32) -> (i32, i32) {
    %c0_i32 = arith.constant 0 : i32
    %c0_i32_0 = arith.constant 0 : i32
    %c0_i32_1 = arith.constant 0 : i32
    return %c0_i32, %c0_i32_0 : i32, i32
  }
  func.func @transform_3(%arg0: i32) -> (i32, i32) {
    %c0_i32 = arith.constant 0 : i32
    %c0_i32_0 = arith.constant 0 : i32
    %c0_i32_1 = arith.constant 0 : i32
    return %c0_i32, %c0_i32_0 : i32, i32
  }
  func.func @transform_4(%arg0: i32) -> (i32, i32) {
    %c0_i32 = arith.constant 0 : i32
    %c0_i32_0 = arith.constant 0 : i32
    %c0_i32_1 = arith.constant 0 : i32
    return %c0_i32, %c0_i32_0 : i32, i32
  }
  func.func @transform_5(%arg0: i32) -> (i32, i32) {
    %c0_i32 = arith.constant 0 : i32
    %c0_i32_0 = arith.constant 0 : i32
    return %arg0, %c0_i32 : i32, i32
  }
}

</mosaic_0001>

<llo_original>
// kernel: _lambda_.1
$region0: #{_lambda_.1}
  #allocation0 [shape = 'u32[]', space=smem, size = 0x4, offset = 0x4, fixed_abs, tag = 'smem constant byte address 0x4 - core index']
  #allocation1 [shape = 'u32[144,128]{1,0:T(1,128)}', space=vmem, size = 0x12000, scoped, tag = 'internal scratch']
  %s0 = inlined_call_operand.vmem [shape: f32[8,32], index: 0, kind: input, shape index: {}]
  %s1 = inlined_call_operand.vmem [shape: bf16[32,512], index: 1, kind: input, shape index: {}]
  %s2 = inlined_call_operand.vmem [shape: f32[1,512], index: 2, kind: input, shape index: {}]
  %s3 = inlined_call_operand.hbm [shape: bf16[512,128], index: 3, kind: input, shape index: {}]
  %s4 = inlined_call_operand.vmem [shape: f32[1,128], index: 4, kind: input, shape index: {}]
  %s5 = inlined_call_operand.vmem [shape: bf16[8,128], index: 5, kind: output, shape index: {}]
  %s6 = sld [smem:[#allocation0]]
  $region34: #{_lambda_.1} parent=0
    _
  %s8 = ssub.s32 1, %s6
  %s9 = scalar_select 0, %s8, %s6
  $region1: #{_lambda_.1} parent=0
    #allocation2 [shape = 'u8[131072]{0}', space=vmem, size = 0x20000, scoped, tag = 'input window, operand 3, single buffered']
    #allocation3 [shape = 's32[1]{0}', space=sflag, size = 0x4, scoped, tag = 'scoped memory for _lambda_.1']
    %10 = vsyncpa [#allocation3], 0
    // Predicated region
    $region2: #{_lambda_.1} parent=1 // pred_check
      _
    $region3: #{_lambda_.1} parent=1 // pred_check_branch
      %12 = sbr.rel (0) target = $region5
    $region4: #{_lambda_.1} parent=1 // pred_region
      _
    $region5: #{_lambda_.1} parent=1 // pred_fallthru
      _
    // Predicated region
    $region6: #{_lambda_.1} parent=1 // pred_check
      _
    $region7: #{_lambda_.1} parent=1 // pred_check_branch
      %14 = sbr.rel (0) target = $region9
    $region8: #{_lambda_.1} parent=1 // pred_region
      _
    $region9: #{_lambda_.1} parent=1 // pred_fallthru
      _
    // Predicated region
    $region10: #{_lambda_.1} parent=1 // pred_check
      _
    $region11: #{_lambda_.1} parent=1 // pred_check_branch
      %16 = sbr.rel (0) target = $region13
    $region12: #{_lambda_.1} parent=1 // pred_region
      _
    $region13: #{_lambda_.1} parent=1 // pred_fallthru
      _
    // Predicated region
    $region14: #{_lambda_.1} parent=1 // pred_check
      _
    $region15: #{_lambda_.1} parent=1 // pred_check_branch
      %18 = sbr.rel (0) target = $region17
    $region16: #{_lambda_.1} parent=1 // pred_region
      %s20 = ssub.s32 4096, 4096
      %21 = vsyncadd [#allocation3], %s20
      %s22 = sshll.u32 [#allocation2], 4
      %s23 = int_to_ptr.vmem [resolvable:$true] %s22
      %28 = dma.hbm_to_vmem [thread:$0]  %s3, 4096, %s23, [#allocation3], 64, 64, 4
    $region17: #{_lambda_.1} parent=1 // pred_fallthru
      _
    // Predicated region
    $region18: #{_lambda_.1} parent=1 // pred_check
      _
    $region19: #{_lambda_.1} parent=1 // pred_check_branch
      %30 = sbr.rel (0) target = $region21
    $region20: #{_lambda_.1} parent=1 // pred_region
      _
    $region21: #{_lambda_.1} parent=1 // pred_fallthru
      _
    // Predicated region
    $region22: #{_lambda_.1} parent=1 // pred_check
      _
    $region23: #{_lambda_.1} parent=1 // pred_check_branch
      %32 = sbr.rel (0) target = $region25
    $region24: #{_lambda_.1} parent=1 // pred_region
      %33 = dma.done [#allocation3], 4096
    $region25: #{_lambda_.1} parent=1 // pred_fallthru
      _
    %v35 = vld [vmem:[%s0] sm:$0xff]
    %v36 = vpack.c.bf16 %v35, %v35
    %v37 = vld [vmem:[%s1] sm:$0xff]
    %v38 = vld [vmem:[%s1 + $0x8] sm:$0xff]
    %v39 = vld [vmem:[%s1 + $0x10] sm:$0xff]
    %v40 = vld [vmem:[%s1 + $0x18] sm:$0xff]
    %v41 = vld [vmem:[%s1 + $0x20] sm:$0xff]
    %v42 = vld [vmem:[%s1 + $0x28] sm:$0xff]
    %v43 = vld [vmem:[%s1 + $0x30] sm:$0xff]
    %v44 = vld [vmem:[%s1 + $0x38] sm:$0xff]
    %v45 = vld [vmem:[%s2] sm:$0xf]
    %v47 = vlaneseq
    %v48 = vshrl.u32 %v47, 7
    %v49 = vsub.s32 0, %v48
    %v50 = vrot.slane %v45, %v49
    %v51 = vlaneseq
    %v52 = vshrl.u32 %v51, 7
    %v53 = vsub.s32 1, %v52
    %v54 = vrot.slane %v45, %v53
    %v55 = vlaneseq
    %v56 = vshrl.u32 %v55, 7
    %v57 = vsub.s32 2, %v56
    %v58 = vrot.slane %v45, %v57
    %v59 = vlaneseq
    %v60 = vshrl.u32 %v59, 7
    %v61 = vsub.s32 3, %v60
    %v62 = vrot.slane %v45, %v61
    %v75 = vunpack.c.l.b16 %v37
    %v76 = vunpack.c.h.b16 %v37
    %v77 = vunpack.c.l.b16 %v38
    %v78 = vunpack.c.h.b16 %v38
    %v79 = vunpack.c.l.b16 %v39
    %v80 = vunpack.c.h.b16 %v39
    %v81 = vunpack.c.l.b16 %v40
    %v82 = vunpack.c.h.b16 %v40
    %v83 = vunpack.c.l.b16 %v41
    %v84 = vunpack.c.h.b16 %v41
    %v85 = vunpack.c.l.b16 %v42
    %v86 = vunpack.c.h.b16 %v42
    %v87 = vunpack.c.l.b16 %v43
    %v88 = vunpack.c.h.b16 %v43
    %v89 = vunpack.c.l.b16 %v44
    %v90 = vunpack.c.h.b16 %v44
    %v91 = vpack.c.b16 %v79, %v75
    %v92 = vpack.c.b16 %v80, %v76
    %v93 = vpack.c.b16 %v81, %v77
    %v94 = vpack.c.b16 %v82, %v78
    %v95 = vpack.c.b16 %v87, %v83
    %v96 = vpack.c.b16 %v88, %v84
    %v97 = vpack.c.b16 %v89, %v85
    %v98 = vpack.c.b16 %v90, %v86
    %vm107 = vcmask 261120
    %v109 = vsel %vm107, %v36, 0
    %111 = vmatprep.subr.bf16.mxu0 %v92
    %112 = vmatpush1.bf16.msra.mxu0 %v91
    %113 = vmatprep.subr.bf16.mxu0 %v96
    %114 = vmatpush1.bf16.msra.mxu0 %v95
    %115 = vmatprep.subr.bf16.mxu0 0
    %116 = vmatpush1.bf16.msra.mxu0 0
    %117 = vmatprep.subr.bf16.mxu0 0
    %118 = vmatpush1.bf16.msra.mxu0 0
    %119 = vmatprep.subr.bf16.mxu0 0
    %120 = vmatpush1.bf16.msra.mxu0 0
    %121 = vmatprep.subr.bf16.mxu0 0
    %122 = vmatpush1.bf16.msra.mxu0 0
    %123 = vmatprep.subr.bf16.mxu0 0
    %124 = vmatpush1.bf16.msra.mxu0 0
    %125 = vmatprep.subr.bf16.mxu0 0
    %126 = vmatpush1.bf16.msra.mxu0 0
    %127 = vmatprep.subr.bf16.mxu0 0
    %128 = vmatpush1.bf16.msra.mxu0 0
    %129 = vmatprep.subr.bf16.mxu0 0
    %130 = vmatpush1.bf16.msra.mxu0 0
    %131 = vmatprep.subr.bf16.mxu0 0
    %132 = vmatpush1.bf16.msra.mxu0 0
    %133 = vmatprep.subr.bf16.mxu0 0
    %134 = vmatpush1.bf16.msra.mxu0 0
    %135 = vmatprep.subr.bf16.mxu0 0
    %136 = vmatpush1.bf16.msra.mxu0 0
    %137 = vmatprep.subr.bf16.mxu0 0
    %138 = vmatpush1.bf16.msra.mxu0 0
    %139 = vmatprep.subr.bf16.mxu0 0
    %140 = vmatpush1.bf16.msra.mxu0 0
    %141 = vmatprep.subr.bf16.mxu0 0
    %142 = vmatpush1.bf16.msra.mxu0 0
    %143 = vmatprep.mubr.bf16.mxu0 0
    %144 = vmatmul.mubr.bf16.gmra.mrb[0].mxu0 %v109
    %v145 = vpop.f32.mrb[0].mxu0
    %v146 = vadd.f32 %v50, %v145
    %v147 = vpop.f32.mrb[0].mxu0
    %v148 = vadd.f32 %v54, %v147
    %v149 = vpop.f32.mrb[0].mxu0
    %v150 = vpop.f32.mrb[0].mxu0
    %151 = vdwg.mxu0
    %152 = vmatprep.subr.bf16.mxu0 %v94
    %153 = vmatpush1.bf16.msra.mxu0 %v93
    %154 = vmatprep.subr.bf16.mxu0 %v98
    %155 = vmatpush1.bf16.msra.mxu0 %v97
    %156 = vmatprep.subr.bf16.mxu0 0
    %157 = vmatpush1.bf16.msra.mxu0 0
    %158 = vmatprep.subr.bf16.mxu0 0
    %159 = vmatpush1.bf16.msra.mxu0 0
    %160 = vmatprep.subr.bf16.mxu0 0
    %161 = vmatpush1.bf16.msra.mxu0 0
    %162 = vmatprep.subr.bf16.mxu0 0
    %163 = vmatpush1.bf16.msra.mxu0 0
    %164 = vmatprep.subr.bf16.mxu0 0
    %165 = vmatpush1.bf16.msra.mxu0 0
    %166 = vmatprep.subr.bf16.mxu0 0
    %167 = vmatpush1.bf16.msra.mxu0 0
    %168 = vmatprep.subr.bf16.mxu0 0
    %169 = vmatpush1.bf16.msra.mxu0 0
    %170 = vmatprep.subr.bf16.mxu0 0
    %171 = vmatpush1.bf16.msra.mxu0 0
    %172 = vmatprep.subr.bf16.mxu0 0
    %173 = vmatpush1.bf16.msra.mxu0 0
    %174 = vmatprep.subr.bf16.mxu0 0
    %175 = vmatpush1.bf16.msra.mxu0 0
    %176 = vmatprep.subr.bf16.mxu0 0
    %177 = vmatpush1.bf16.msra.mxu0 0
    %178 = vmatprep.subr.bf16.mxu0 0
    %179 = vmatpush1.bf16.msra.mxu0 0
    %180 = vmatprep.subr.bf16.mxu0 0
    %181 = vmatpush1.bf16.msra.mxu0 0
    %182 = vmatprep.subr.bf16.mxu0 0
    %183 = vmatpush1.bf16.msra.mxu0 0
    %184 = vmatprep.mubr.bf16.mxu0 0
    %185 = vmatmul.mubr.bf16.gmra.mrb[0].mxu0 %v109
    %v186 = vpop.f32.mrb[0].mxu0
    %v187 = vadd.f32 %v58, %v186
    %v188 = vpop.f32.mrb[0].mxu0
    %v189 = vadd.f32 %v62, %v188
    %v190 = vpop.f32.mrb[0].mxu0
    %v191 = vpop.f32.mrb[0].mxu0
    %192 = vdwg.mxu0
    %v193 = vmax.f32 %v146, 0.0
    %v194 = vmax.f32 %v148, 0.0
    %v195 = vmax.f32 %v187, 0.0
    %v196 = vmax.f32 %v189, 0.0
    %v197 = vpack.c.bf16 %v193, %v193
    %v198 = vpack.c.bf16 %v194, %v194
    %v199 = vpack.c.bf16 %v195, %v195
    %v200 = vpack.c.bf16 %v196, %v196
    %v201 = vld [vmem:[#allocation2] sm:$0xf]
    %v202 = vld [vmem:[#allocation2 + $0x4] sm:$0xf]
    %v203 = vld [vmem:[#allocation2 + $0x8] sm:$0xf]
    %v204 = vld [vmem:[#allocation2 + $0xc] sm:$0xf]
    %v205 = vld [vmem:[#allocation2 + $0x10] sm:$0xf]
    %v206 = vld [vmem:[#allocation2 + $0x14] sm:$0xf]
    %v207 = vld [vmem:[#allocation2 + $0x18] sm:$0xf]
    %v208 = vld [vmem:[#allocation2 + $0x1c] sm:$0xf]
    %v209 = vld [vmem:[#allocation2 + $0x20] sm:$0xf]
    %v210 = vld [vmem:[#allocation2 + $0x24] sm:$0xf]
    %v211 = vld [vmem:[#allocation2 + $0x28] sm:$0xf]
    %v212 = vld [vmem:[#allocation2 + $0x2c] sm:$0xf]
    %v213 = vld [vmem:[#allocation2 + $0x30] sm:$0xf]
    %v214 = vld [vmem:[#allocation2 + $0x34] sm:$0xf]
    %v215 = vld [vmem:[#allocation2 + $0x38] sm:$0xf]
    %v216 = vld [vmem:[#allocation2 + $0x3c] sm:$0xf]
    %v217 = vld [vmem:[#allocation2 + $0x40] sm:$0xf]
    %v218 = vld [vmem:[#allocation2 + $0x44] sm:$0xf]
    %v219 = vld [vmem:[#allocation2 + $0x48] sm:$0xf]
    %v220 = vld [vmem:[#allocation2 + $0x4c] sm:$0xf]
    %v221 = vld [vmem:[#allocation2 + $0x50] sm:$0xf]
    %v222 = vld [vmem:[#allocation2 + $0x54] sm:$0xf]
    %v223 = vld [vmem:[#allocation2 + $0x58] sm:$0xf]
    %v224 = vld [vmem:[#allocation2 + $0x5c] sm:$0xf]
    %v225 = vld [vmem:[#allocation2 + $0x60] sm:$0xf]
    %v226 = vld [vmem:[#allocation2 + $0x64] sm:$0xf]
    %v227 = vld [vmem:[#allocation2 + $0x68] sm:$0xf]
    %v228 = vld [vmem:[#allocation2 + $0x6c] sm:$0xf]
    %v229 = vld [vmem:[#allocation2 + $0x70] sm:$0xf]
    %v230 = vld [vmem:[#allocation2 + $0x74] sm:$0xf]
    %v231 = vld [vmem:[#allocation2 + $0x78] sm:$0xf]
    %v232 = vld [vmem:[#allocation2 + $0x7c] sm:$0xf]
    %v233 = vld [vmem:[#allocation2 + $0x80] sm:$0xf]
    %v234 = vld [vmem:[#allocation2 + $0x84] sm:$0xf]
    %v235 = vld [vmem:[#allocation2 + $0x88] sm:$0xf]
    %v236 = vld [vmem:[#allocation2 + $0x8c] sm:$0xf]
    %v237 = vld [vmem:[#allocation2 + $0x90] sm:$0xf]
    %v238 = vld [vmem:[#allocation2 + $0x94] sm:$0xf]
    %v239 = vld [vmem:[#allocation2 + $0x98] sm:$0xf]
    %v240 = vld [vmem:[#allocation2 + $0x9c] sm:$0xf]
    %v241 = vld [vmem:[#allocation2 + $0xa0] sm:$0xf]
    %v242 = vld [vmem:[#allocation2 + $0xa4] sm:$0xf]
    %v243 = vld [vmem:[#allocation2 + $0xa8] sm:$0xf]
    %v244 = vld [vmem:[#allocation2 + $0xac] sm:$0xf]
    %v245 = vld [vmem:[#allocation2 + $0xb0] sm:$0xf]
    %v246 = vld [vmem:[#allocation2 + $0xb4] sm:$0xf]
    %v247 = vld [vmem:[#allocation2 + $0xb8] sm:$0xf]
    %v248 = vld [vmem:[#allocation2 + $0xbc] sm:$0xf]
    %v249 = vld [vmem:[#allocation2 + $0xc0] sm:$0xf]
    %v250 = vld [vmem:[#allocation2 + $0xc4] sm:$0xf]
    %v251 = vld [vmem:[#allocation2 + $0xc8] sm:$0xf]
    %v252 = vld [vmem:[#allocation2 + $0xcc] sm:$0xf]
    %v253 = vld [vmem:[#allocation2 + $0xd0] sm:$0xf]
    %v254 = vld [vmem:[#allocation2 + $0xd4] sm:$0xf]
    %v255 = vld [vmem:[#allocation2 + $0xd8] sm:$0xf]
    %v256 = vld [vmem:[#allocation2 + $0xdc] sm:$0xf]
    %v257 = vld [vmem:[#allocation2 + $0xe0] sm:$0xf]
    %v258 = vld [vmem:[#allocation2 + $0xe4] sm:$0xf]
    %v259 = vld [vmem:[#allocation2 + $0xe8] sm:$0xf]
    %v260 = vld [vmem:[#allocation2 + $0xec] sm:$0xf]
    %v261 = vld [vmem:[#allocation2 + $0xf0] sm:$0xf]
    %v262 = vld [vmem:[#allocation2 + $0xf4] sm:$0xf]
    %v263 = vld [vmem:[#allocation2 + $0xf8] sm:$0xf]
    %v264 = vld [vmem:[#allocation2 + $0xfc] sm:$0xf]
    %v265 = vld [vmem:[%s4] sm:$0x1]
    %v267 = vlaneseq
    %v268 = vshrl.u32 %v267, 7
    %v269 = vsub.s32 0, %v268
    %v270 = vrot.slane %v265, %v269
    %v336 = vunpack.c.l.b16 %v201
    %v337 = vunpack.c.l.b16 %v202
    %v338 = vunpack.c.l.b16 %v203
    %v339 = vunpack.c.l.b16 %v204
    %v340 = vunpack.c.l.b16 %v205
    %v341 = vunpack.c.l.b16 %v206
    %v342 = vunpack.c.l.b16 %v207
    %v343 = vunpack.c.l.b16 %v208
    %v344 = vunpack.c.l.b16 %v209
    %v345 = vunpack.c.l.b16 %v210
    %v346 = vunpack.c.l.b16 %v211
    %v347 = vunpack.c.l.b16 %v212
    %v348 = vunpack.c.l.b16 %v213
    %v349 = vunpack.c.l.b16 %v214
    %v350 = vunpack.c.l.b16 %v215
    %v351 = vunpack.c.l.b16 %v216
    %v352 = vunpack.c.l.b16 %v217
    %v353 = vunpack.c.l.b16 %v218
    %v354 = vunpack.c.l.b16 %v219
    %v355 = vunpack.c.l.b16 %v220
    %v356 = vunpack.c.l.b16 %v221
    %v357 = vunpack.c.l.b16 %v222
    %v358 = vunpack.c.l.b16 %v223
    %v359 = vunpack.c.l.b16 %v224
    %v360 = vunpack.c.l.b16 %v225
    %v361 = vunpack.c.l.b16 %v226
    %v362 = vunpack.c.l.b16 %v227
    %v363 = vunpack.c.l.b16 %v228
    %v364 = vunpack.c.l.b16 %v229
    %v365 = vunpack.c.l.b16 %v230
    %v366 = vunpack.c.l.b16 %v231
    %v367 = vunpack.c.l.b16 %v232
    %v368 = vunpack.c.l.b16 %v233
    %v369 = vunpack.c.l.b16 %v234
    %v370 = vunpack.c.l.b16 %v235
    %v371 = vunpack.c.l.b16 %v236
    %v372 = vunpack.c.l.b16 %v237
    %v373 = vunpack.c.l.b16 %v238
    %v374 = vunpack.c.l.b16 %v239
    %v375 = vunpack.c.l.b16 %v240
    %v376 = vunpack.c.l.b16 %v241
    %v377 = vunpack.c.l.b16 %v242
    %v378 = vunpack.c.l.b16 %v243
    %v379 = vunpack.c.l.b16 %v244
    %v380 = vunpack.c.l.b16 %v245
    %v381 = vunpack.c.l.b16 %v246
    %v382 = vunpack.c.l.b16 %v247
    %v383 = vunpack.c.l.b16 %v248
    %v384 = vunpack.c.l.b16 %v249
    %v385 = vunpack.c.l.b16 %v250
    %v386 = vunpack.c.l.b16 %v251
    %v387 = vunpack.c.l.b16 %v252
    %v388 = vunpack.c.l.b16 %v253
    %v389 = vunpack.c.l.b16 %v254
    %v390 = vunpack.c.l.b16 %v255
    %v391 = vunpack.c.l.b16 %v256
    %v392 = vunpack.c.l.b16 %v257
    %v393 = vunpack.c.l.b16 %v258
    %v394 = vunpack.c.l.b16 %v259
    %v395 = vunpack.c.l.b16 %v260
    %v396 = vunpack.c.l.b16 %v261
    %v397 = vunpack.c.l.b16 %v262
    %v398 = vunpack.c.l.b16 %v263
    %v399 = vunpack.c.l.b16 %v264
    %v400 = vpack.c.b16 %v337, %v336
    %v401 = vpack.c.b16 %v339, %v338
    %v402 = vpack.c.b16 %v341, %v340
    %v403 = vpack.c.b16 %v343, %v342
    %v404 = vpack.c.b16 %v345, %v344
    %v405 = vpack.c.b16 %v347, %v346
    %v406 = vpack.c.b16 %v349, %v348
    %v407 = vpack.c.b16 %v351, %v350
    %v408 = vpack.c.b16 %v353, %v352
    %v409 = vpack.c.b16 %v355, %v354
    %v410 = vpack.c.b16 %v357, %v356
    %v411 = vpack.c.b16 %v359, %v358
    %v412 = vpack.c.b16 %v361, %v360
    %v413 = vpack.c.b16 %v363, %v362
    %v414 = vpack.c.b16 %v365, %v364
    %v415 = vpack.c.b16 %v367, %v366
    %v416 = vpack.c.b16 %v369, %v368
    %v417 = vpack.c.b16 %v371, %v370
    %v418 = vpack.c.b16 %v373, %v372
    %v419 = vpack.c.b16 %v375, %v374
    %v420 = vpack.c.b16 %v377, %v376
    %v421 = vpack.c.b16 %v379, %v378
    %v422 = vpack.c.b16 %v381, %v380
    %v423 = vpack.c.b16 %v383, %v382
    %v424 = vpack.c.b16 %v385, %v384
    %v425 = vpack.c.b16 %v387, %v386
    %v426 = vpack.c.b16 %v389, %v388
    %v427 = vpack.c.b16 %v391, %v390
    %v428 = vpack.c.b16 %v393, %v392
    %v429 = vpack.c.b16 %v395, %v394
    %v430 = vpack.c.b16 %v397, %v396
    %v431 = vpack.c.b16 %v399, %v398
    %464 = vmatprep.subr.bf16.mxu0 0
    %465 = vmatpush1.bf16.msra.mxu0 %v400
    %466 = vmatprep.subr.bf16.mxu0 0
    %467 = vmatpush1.bf16.msra.mxu0 %v401
    %468 = vmatprep.subr.bf16.mxu0 0
    %469 = vmatpush1.bf16.msra.mxu0 %v402
    %470 = vmatprep.subr.bf16.mxu0 0
    %471 = vmatpush1.bf16.msra.mxu0 %v403
    %472 = vmatprep.subr.bf16.mxu0 0
    %473 = vmatpush1.bf16.msra.mxu0 %v404
    %474 = vmatprep.subr.bf16.mxu0 0
    %475 = vmatpush1.bf16.msra.mxu0 %v405
    %476 = vmatprep.subr.bf16.mxu0 0
    %477 = vmatpush1.bf16.msra.mxu0 %v406
    %478 = vmatprep.subr.bf16.mxu0 0
    %479 = vmatpush1.bf16.msra.mxu0 %v407
    %480 = vmatprep.subr.bf16.mxu0 0
    %481 = vmatpush1.bf16.msra.mxu0 %v408
    %482 = vmatprep.subr.bf16.mxu0 0
    %483 = vmatpush1.bf16.msra.mxu0 %v409
    %484 = vmatprep.subr.bf16.mxu0 0
    %485 = vmatpush1.bf16.msra.mxu0 %v410
    %486 = vmatprep.subr.bf16.mxu0 0
    %487 = vmatpush1.bf16.msra.mxu0 %v411
    %488 = vmatprep.subr.bf16.mxu0 0
    %489 = vmatpush1.bf16.msra.mxu0 %v412
    %490 = vmatprep.subr.bf16.mxu0 0
    %491 = vmatpush1.bf16.msra.mxu0 %v413
    %492 = vmatprep.subr.bf16.mxu0 0
    %493 = vmatpush1.bf16.msra.mxu0 %v414
    %494 = vmatprep.subr.bf16.mxu0 0
    %495 = vmatpush1.bf16.msra.mxu0 %v415
    %496 = vmatprep.mubr.bf16.mxu0 %v198
    %497 = vmatmul.mubr.bf16.gmra.mrb[0].mxu0 %v197
    %v498 = vpop.f32.mrb[0].mxu0
    %v499 = vadd.f32 %v270, %v498
    %v500 = vpop.f32.mrb[0].mxu0
    %v501 = vpop.f32.mrb[0].mxu0
    %v502 = vpop.f32.mrb[0].mxu0
    %503 = vdwg.mxu0
    %504 = vmatprep.subr.bf16.mxu0 0
    %505 = vmatpush1.bf16.msra.mxu0 %v416
    %506 = vmatprep.subr.bf16.mxu0 0
    %507 = vmatpush1.bf16.msra.mxu0 %v417
    %508 = vmatprep.subr.bf16.mxu0 0
    %509 = vmatpush1.bf16.msra.mxu0 %v418
    %510 = vmatprep.subr.bf16.mxu0 0
    %511 = vmatpush1.bf16.msra.mxu0 %v419
    %512 = vmatprep.subr.bf16.mxu0 0
    %513 = vmatpush1.bf16.msra.mxu0 %v420
    %514 = vmatprep.subr.bf16.mxu0 0
    %515 = vmatpush1.bf16.msra.mxu0 %v421
    %516 = vmatprep.subr.bf16.mxu0 0
    %517 = vmatpush1.bf16.msra.mxu0 %v422
    %518 = vmatprep.subr.bf16.mxu0 0
    %519 = vmatpush1.bf16.msra.mxu0 %v423
    %520 = vmatprep.subr.bf16.mxu0 0
    %521 = vmatpush1.bf16.msra.mxu0 %v424
    %522 = vmatprep.subr.bf16.mxu0 0
    %523 = vmatpush1.bf16.msra.mxu0 %v425
    %524 = vmatprep.subr.bf16.mxu0 0
    %525 = vmatpush1.bf16.msra.mxu0 %v426
    %526 = vmatprep.subr.bf16.mxu0 0
    %527 = vmatpush1.bf16.msra.mxu0 %v427
    %528 = vmatprep.subr.bf16.mxu0 0
    %529 = vmatpush1.bf16.msra.mxu0 %v428
    %530 = vmatprep.subr.bf16.mxu0 0
    %531 = vmatpush1.bf16.msra.mxu0 %v429
    %532 = vmatprep.subr.bf16.mxu0 0
    %533 = vmatpush1.bf16.msra.mxu0 %v430
    %534 = vmatprep.subr.bf16.mxu0 0
    %535 = vmatpush1.bf16.msra.mxu0 %v431
    %536 = vmatprep.mubr.bf16.mxu0 %v200
    %537 = vmatmul.mubr.bf16.gmra.mrb[0].mxu0 %v199
    %v538 = vpop.f32.mrb[0].mxu0
    %v539 = vadd.f32 %v499, %v538
    %v540 = vpop.f32.mrb[0].mxu0
    %v541 = vpop.f32.mrb[0].mxu0
    %v542 = vpop.f32.mrb[0].mxu0
    %543 = vdwg.mxu0
    %v544 = vpack.c.bf16 %v539, %v539
    %545 = vst [vmem:[%s5] sm:$0xf] %v544
    // Predicated region
    $region26: #{_lambda_.1} parent=1 // pred_check
      _
    $region27: #{_lambda_.1} parent=1 // pred_check_branch
      %547 = sbr.rel (0) target = $region29
    $region28: #{_lambda_.1} parent=1 // pred_region
      _
    $region29: #{_lambda_.1} parent=1 // pred_fallthru
      _
    // Predicated region
    $region30: #{_lambda_.1} parent=1 // pred_check
      _
    $region31: #{_lambda_.1} parent=1 // pred_check_branch
      %549 = sbr.rel (0) target = $region33
    $region32: #{_lambda_.1} parent=1 // pred_region
      _
    $region33: #{_lambda_.1} parent=1 // pred_fallthru
      _
    %550 = vsyncpa [#allocation3], 1

</llo_original>
